<compile_context>
chip_gen: v5e
topology: v5e:2x2
jax: 0.10.0
libtpu: 0.0.40
codegen_flags: <defaults>
</compile_context>

<pallas_src>
import jax
import jax.numpy as jnp
from jax import lax
from jax.experimental import pallas as pl
from jax.experimental.pallas import tpu as pltpu


# ---------------------------------------------------------------------------
# Kernel
# ---------------------------------------------------------------------------
def _rope_kernel(x_ref, cos_ref, sin_ref, o_ref):
    x = x_ref[...]
    cos = cos_ref[...]
    sin_s = sin_ref[...]            # sign-baked sin (even lanes already carry -sin)

    ax = x.ndim - 1
    L = x.shape[ax]
    lane = lax.broadcasted_iota(jnp.int32, x.shape, ax)
    is_even = (lane & 1) == 0

    # jnp.roll semantics: roll(x, s)[j] == x[(j - s) % L]; shifts must be >= 0.
    x_next = pltpu.roll(x, shift=L - 1, axis=ax)    # x[..., (j + 1) % L]
    x_prev = pltpu.roll(x, shift=1, axis=ax)        # x[..., (j - 1) % L]
    # Pair swap (2k <-> 2k+1); the wrapped lanes are never selected since L is even.
    x_swap = jnp.where(is_even, x_next, x_prev)

    o_ref[...] = (x * cos + x_swap * sin_s).astype(o_ref.dtype)


# ---------------------------------------------------------------------------
# Tiling helpers (keep 4 arrays x 2 buffers well under scoped VMEM defaults)
# ---------------------------------------------------------------------------
_MAX_BLOCK_BYTES = 1 << 20      # per-array block budget (~8 MiB total with 8 blocks)


def _pick_row_tile(n_rows, n_lanes, itemsize):
    max_rows = max(1, _MAX_BLOCK_BYTES // (n_lanes * itemsize))
    if n_rows <= max_rows or n_rows % 8 != 0:
        return n_rows
    cand = min(n_rows, (max_rows // 8) * 8)
    while cand >= 8:
        if n_rows % cand == 0:
            return cand
        cand -= 8
    return n_rows


def _pick_batch_tile(n_batch, block_rows, n_lanes, itemsize):
    max_b = max(1, _MAX_BLOCK_BYTES // (block_rows * n_lanes * itemsize))
    cand = min(n_batch, max_b)
    while cand > 1:
        if n_batch % cand == 0:
            return cand
        cand -= 1
    return 1


# ---------------------------------------------------------------------------
# pallas_call wrappers
# ---------------------------------------------------------------------------
def _rope_rows_pallas(x2, cos2, sin2):
    """Per-token cos/sin: everything streamed as a flat (rows, lanes) slab."""
    R, L = x2.shape
    tr = _pick_row_tile(R, L, x2.dtype.itemsize)
    spec = pl.BlockSpec((tr, L), lambda r: (r, 0))
    return pl.pallas_call(
        _rope_kernel,
        out_shape=jax.ShapeDtypeStruct((R, L), x2.dtype),
        grid=(R // tr,),
        in_specs=[spec, spec, spec],
        out_specs=spec,
        compiler_params=pltpu.CompilerParams(dimension_semantics=("parallel",)),
    )(x2, cos2, sin2)


def _rope_shared_pallas(x3, cos2, sin2):
    """Positions shared across the batch: cos/sin are DMA'd once (constant
    index_map) and stay VMEM-resident; only x/out are streamed."""
    B, Sf, L = x3.shape
    tb = _pick_batch_tile(B, Sf, L, x3.dtype.itemsize)
    x_spec = pl.BlockSpec((tb, Sf, L), lambda b: (b, 0, 0))
    tbl_spec = pl.BlockSpec((Sf, L), lambda b: (0, 0))
    return pl.pallas_call(
        _rope_kernel,
        out_shape=jax.ShapeDtypeStruct((B, Sf, L), x3.dtype),
        grid=(B // tb,),
        in_specs=[x_spec, tbl_spec, tbl_spec],
        out_specs=x_spec,
        compiler_params=pltpu.CompilerParams(dimension_semantics=("parallel",)),
    )(x3, cos2, sin2)


# ---------------------------------------------------------------------------
# Module
# ---------------------------------------------------------------------------
class RoPE:
    """JAX/Pallas equivalent of the PyTorch RoPE module."""

    def __init__(self, theta: float, d_k: int, max_seq_len: int):
        assert d_k % 2 == 0, "query & key vector must have an even length"
        half = jnp.arange(0, d_k // 2, dtype=jnp.float32)
        t = 1.0 / jnp.power(theta, 2.0 / d_k * jnp.repeat(half, 2))     # (d_k,)
        i = jnp.arange(0, max_seq_len, dtype=jnp.float32)               # (L,)
        ang = i[:, None] * t[None, :]                                   # (L, d_k)
        self.cos = jnp.cos(ang)
        self.sin = jnp.sin(ang)
        # Bake the alternating sign into sin so the kernel only needs a swap:
        #   out = x * cos + swap(x) * sin_signed
        sign = jnp.tile(jnp.array([-1.0, 1.0], dtype=jnp.float32), d_k // 2)
        self._sin_signed = self.sin * sign[None, :]
        self.d_k = d_k
        self.max_seq_len = max_seq_len

    def __call__(self, x: jax.Array, token_positions: jax.Array) -> jax.Array:
        orig_shape = x.shape
        S, D = orig_shape[-2], orig_shape[-1]
        assert D == self.d_k

        def fold_factor(n_tokens):
            # Fold F consecutive tokens into one 128-lane row when possible.
            if D < 128 and 128 % D == 0:
                f = 128 // D
                if n_tokens % f == 0:
                    return f
            return 1

        # glue: gather rotation rows at the requested positions
        cos_g = self.cos[token_positions]           # (..., S, d_k)
        sin_g = self._sin_signed[token_positions]   # (..., S, d_k)

        if token_positions.ndim == 1:
            # Shared positions: do NOT replicate cos/sin across the batch.
            xf = x.reshape(-1, S, D)
            F = fold_factor(S)
            x3 = xf.reshape(xf.shape[0], S // F, F * D)
            c2 = cos_g.reshape(S // F, F * D)
            s2 = sin_g.reshape(S // F, F * D)
            out = _rope_shared_pallas(x3, c2, s2)
        else:
            # Per-batch positions: tables genuinely differ per row; flatten
            # everything into one lane-dense (rows, lanes) slab.
            cos_b = jnp.broadcast_to(cos_g, x.shape)
            sin_b = jnp.broadcast_to(sin_g, x.shape)
            n_tokens = 1
            for d in orig_shape[:-1]:
                n_tokens *= d
            F = fold_factor(n_tokens)
            L = F * D
            out = _rope_rows_pallas(
                x.reshape(-1, L), cos_b.reshape(-1, L), sin_b.reshape(-1, L)
            )
        return out.reshape(orig_shape)


# ---------------------------------------------------------------------------
# Pure-jnp reference (replicates the PyTorch forward) for verification
# ---------------------------------------------------------------------------
def _rope_reference(x, cos, sin, token_positions):
    cos_g = cos[token_positions]
    sin_g = sin[token_positions]
    D = x.shape[-1]
    xr = x.reshape(*x.shape[:-1], D // 2, 2)
    x_neg = jnp.stack([-xr[..., 1], xr[..., 0]], axis=-1).reshape(x.shape)
    return x * cos_g + x_neg * sin_g


if __name__ == "__main__":
    theta = 10000.0
    d_k = 32
    max_seq_len = 16
    B, S = 2, 8

    key = jax.random.PRNGKey(0)
    kx, kp = jax.random.split(key)
    x = jax.random.normal(kx, (B, S, d_k), dtype=jnp.float32)
    pos_batched = jax.random.randint(kp, (B, S), 0, max_seq_len, dtype=jnp.int32)
    pos_shared = jnp.arange(S, dtype=jnp.int32)      # shared-positions fast path

    rope = RoPE(theta, d_k, max_seq_len)

    out_b = jax.block_until_ready(rope(x, pos_batched))
    out_s = jax.block_until_ready(rope(x, pos_shared))

    ref_b = _rope_reference(x, rope.cos, rope.sin, pos_batched)
    ref_s = _rope_reference(x, rope.cos, rope.sin, pos_shared)

    assert out_b.shape == x.shape and out_b.dtype == x.dtype
    assert out_s.shape == x.shape and out_s.dtype == x.dtype
    assert jnp.allclose(out_b, ref_b, atol=1e-5, rtol=1e-5), "mismatch (per-batch positions)"
    assert jnp.allclose(out_s, ref_s, atol=1e-5, rtol=1e-5), "mismatch (shared positions)"

    print("KERNEL_OK")
</pallas_src>

<mosaic_0001>
module attributes {stable_mosaic.version = 11 : i64} {
  func.func @_rope_kernel(%arg0: i32, %arg1: memref<4x128xf32, #tpu.memory_space<vmem>>, %arg2: memref<4x128xf32, #tpu.memory_space<vmem>>, %arg3: memref<4x128xf32, #tpu.memory_space<vmem>>, %arg4: memref<4x128xf32, #tpu.memory_space<vmem>>) attributes {dimension_semantics = [#tpu.dimension_semantics<parallel>], iteration_bounds = array<i64: 1>, scalar_prefetch = 0 : i64, scratch_operands = 0 : i64, tpu.core_type = #tpu.core_type<tc>, window_params = [{transform_indices = @transform_0, window_bounds = array<i64: 4, 128>}, {transform_indices = @transform_1, window_bounds = array<i64: 4, 128>}, {transform_indices = @transform_2, window_bounds = array<i64: 4, 128>}, {transform_indices = @transform_3, window_bounds = array<i64: 4, 128>}]} {
    %c0 = arith.constant 0 : index
    %c0_0 = arith.constant 0 : index
    %0 = vector.load %arg1[%c0, %c0_0] : memref<4x128xf32, #tpu.memory_space<vmem>>, vector<4x128xf32>
    %c0_1 = arith.constant 0 : index
    %c0_2 = arith.constant 0 : index
    %1 = vector.load %arg2[%c0_1, %c0_2] : memref<4x128xf32, #tpu.memory_space<vmem>>, vector<4x128xf32>
    %c0_3 = arith.constant 0 : index
    %c0_4 = arith.constant 0 : index
    %2 = vector.load %arg3[%c0_3, %c0_4] : memref<4x128xf32, #tpu.memory_space<vmem>>, vector<4x128xf32>
    %3 = tpu.iota {dimensions = array<i32: 1>} : vector<4x128xi32>
    %c1_i32 = arith.constant 1 : i32
    %4 = vector.broadcast %c1_i32 : i32 to vector<4x128xi32>
    %5 = arith.andi %3, %4 : vector<4x128xi32>
    %c0_i32 = arith.constant 0 : i32
    %6 = vector.broadcast %c0_i32 : i32 to vector<4x128xi32>
    %7 = arith.cmpi eq, %5, %6 : vector<4x128xi32>
    %c127_i32 = arith.constant 127 : i32
    %8 = tpu.dynamic_rotate %0 by %c127_i32 dim 1 : vector<4x128xf32>, i32 -> vector<4x128xf32>
    %c1_i32_5 = arith.constant 1 : i32
    %9 = tpu.dynamic_rotate %0 by %c1_i32_5 dim 1 : vector<4x128xf32>, i32 -> vector<4x128xf32>
    %10 = arith.select %7, %8, %9 : vector<4x128xi1>, vector<4x128xf32>
    %11 = arith.mulf %0, %1 : vector<4x128xf32>
    %12 = arith.mulf %10, %2 : vector<4x128xf32>
    %13 = arith.addf %11, %12 : vector<4x128xf32>
    %c0_6 = arith.constant 0 : index
    %c0_7 = arith.constant 0 : index
    %14 = vector.load %arg4[%c0_6, %c0_7] : memref<4x128xf32, #tpu.memory_space<vmem>>, vector<4x128xf32>
    tpu.vector_store %arg4[%c0_6, %c0_7], %13 {strides = array<i32>} : memref<4x128xf32, #tpu.memory_space<vmem>>, vector<4x128xf32>,
    return
  }
  func.func @transform_0(%arg0: i32) -> (i32, i32) {
    %c0_i32 = arith.constant 0 : i32
    %c0_i32_0 = arith.constant 0 : i32
    return %arg0, %c0_i32 : i32, i32
  }
  func.func @transform_1(%arg0: i32) -> (i32, i32) {
    %c0_i32 = arith.constant 0 : i32
    %c0_i32_0 = arith.constant 0 : i32
    return %arg0, %c0_i32 : i32, i32
  }
  func.func @transform_2(%arg0: i32) -> (i32, i32) {
    %c0_i32 = arith.constant 0 : i32
    %c0_i32_0 = arith.constant 0 : i32
    return %arg0, %c0_i32 : i32, i32
  }
  func.func @transform_3(%arg0: i32) -> (i32, i32) {
    %c0_i32 = arith.constant 0 : i32
    %c0_i32_0 = arith.constant 0 : i32
    return %arg0, %c0_i32 : i32, i32
  }
}

</mosaic_0001>

<llo_original>
// kernel: tpu_custom_call.1
$region0: #{tpu_custom_call.1}
  #allocation0 [shape = 'u32[]', space=smem, size = 0x4, offset = 0x4, fixed_abs, tag = 'smem constant byte address 0x4 - core index']
  #allocation1 [shape = 'u32[72,128]{1,0:T(1,128)}', space=vmem, size = 0x9000, scoped, tag = 'internal scratch']
  %s0 = inlined_call_operand.hbm [shape: f32[4,128], index: 0, kind: input, shape index: {}]
  %s1 = inlined_call_operand.hbm [shape: f32[4,128], index: 1, kind: input, shape index: {}]
  %s2 = inlined_call_operand.hbm [shape: f32[4,128], index: 2, kind: input, shape index: {}]
  %s3 = inlined_call_operand.hbm [shape: f32[4,128], index: 3, kind: output, shape index: {}]
  %s4 = sld [smem:[#allocation0]]
  $region34: #{tpu_custom_call.1} parent=0
    _
  %s6 = ssub.s32 1, %s4
  %s7 = scalar_select 0, %s6, %s4
  $region1: #{tpu_custom_call.1} parent=0
    #allocation2 [shape = 'u8[2048]{0}', space=vmem, size = 0x800, scoped, tag = 'input window, operand 0, single buffered']
    #allocation3 [shape = 's32[1]{0}', space=sflag, size = 0x4, scoped, tag = 'scoped memory for tpu_custom_call.1']
    #allocation4 [shape = 's32[1]{0}', space=sflag, size = 0x4, scoped, tag = 'scoped memory for tpu_custom_call.1']
    #allocation5 [shape = 'u8[2048]{0}', space=vmem, size = 0x800, scoped, tag = 'input window, operand 1, single buffered']
    #allocation6 [shape = 's32[1]{0}', space=sflag, size = 0x4, scoped, tag = 'scoped memory for tpu_custom_call.1']
    #allocation7 [shape = 'u8[2048]{0}', space=vmem, size = 0x800, scoped, tag = 'input window, operand 2, single buffered']
    #allocation8 [shape = 'u8[2048]{0}', space=vmem, size = 0x800, scoped, tag = 'output window, operand 0, single buffered']
    %8 = vsyncpa [#allocation3], 0
    %9 = vsyncpa [#allocation6], 0
    %10 = vsyncpa [#allocation4], 0
    // Predicated region
    $region2: #{tpu_custom_call.1} parent=1 // pred_check
      _
    $region3: #{tpu_custom_call.1} parent=1 // pred_check_branch
      %12 = sbr.rel (0) target = $region5
    $region4: #{tpu_custom_call.1} parent=1 // pred_region
      %14 = vsyncadd [#allocation3], 0
      %s16 = sshll.u32 %s0, 4
      %s17 = int_to_ptr.hbm [resolvable:$true] %s16
      %s18 = sshll.u32 [#allocation2], 4
      %s19 = int_to_ptr.vmem [resolvable:$true] %s18
      %21 = dma.hbm_to_vmem [thread:$0]  %s17, 64, %s19, [#allocation3]
    $region5: #{tpu_custom_call.1} parent=1 // pred_fallthru
      _
    // Predicated region
    $region6: #{tpu_custom_call.1} parent=1 // pred_check
      _
    $region7: #{tpu_custom_call.1} parent=1 // pred_check_branch
      %23 = sbr.rel (0) target = $region9
    $region8: #{tpu_custom_call.1} parent=1 // pred_region
      %25 = vsyncadd [#allocation6], 0
      %s27 = sshll.u32 %s1, 4
      %s28 = int_to_ptr.hbm [resolvable:$true] %s27
      %s29 = sshll.u32 [#allocation5], 4
      %s30 = int_to_ptr.vmem [resolvable:$true] %s29
      %32 = dma.hbm_to_vmem [thread:$0]  %s28, 64, %s30, [#allocation6]
    $region9: #{tpu_custom_call.1} parent=1 // pred_fallthru
      _
    // Predicated region
    $region10: #{tpu_custom_call.1} parent=1 // pred_check
      _
    $region11: #{tpu_custom_call.1} parent=1 // pred_check_branch
      %34 = sbr.rel (0) target = $region13
    $region12: #{tpu_custom_call.1} parent=1 // pred_region
      %36 = vsyncadd [#allocation6], 0
      %s38 = sshll.u32 %s2, 4
      %s39 = int_to_ptr.hbm [resolvable:$true] %s38
      %s40 = sshll.u32 [#allocation7], 4
      %s41 = int_to_ptr.vmem [resolvable:$true] %s40
      %43 = dma.hbm_to_vmem [thread:$0]  %s39, 64, %s41, [#allocation6]
    $region13: #{tpu_custom_call.1} parent=1 // pred_fallthru
      _
    // Predicated region
    $region14: #{tpu_custom_call.1} parent=1 // pred_check
      _
    $region15: #{tpu_custom_call.1} parent=1 // pred_check_branch
      %45 = sbr.rel (0) target = $region17
    $region16: #{tpu_custom_call.1} parent=1 // pred_region
      %47 = dma.done [#allocation3], 64
    $region17: #{tpu_custom_call.1} parent=1 // pred_fallthru
      _
    // Predicated region
    $region18: #{tpu_custom_call.1} parent=1 // pred_check
      _
    $region19: #{tpu_custom_call.1} parent=1 // pred_check_branch
      %49 = sbr.rel (0) target = $region21
    $region20: #{tpu_custom_call.1} parent=1 // pred_region
      %51 = dma.done [#allocation6], 64
    $region21: #{tpu_custom_call.1} parent=1 // pred_fallthru
      _
    // Predicated region
    $region22: #{tpu_custom_call.1} parent=1 // pred_check
      _
    $region23: #{tpu_custom_call.1} parent=1 // pred_check_branch
      %53 = sbr.rel (0) target = $region25
    $region24: #{tpu_custom_call.1} parent=1 // pred_region
      %55 = dma.done [#allocation6], 64
    $region25: #{tpu_custom_call.1} parent=1 // pred_fallthru
      _
    %v56 = vld [vmem:[#allocation2] sm:$0xf]
    %v57 = vld [vmem:[#allocation5] sm:$0xf]
    %v58 = vld [vmem:[#allocation7] sm:$0xf]
    %v59 = vlaneseq
    %v60 = vand.u32 %v59, 127
    %v61 = vand.u32 %v60, 1
    %vm62 = vcmp.eq.s32.totalorder %v61, 0
    %63 = vrot.lane.b32.xlu0 %v56, 127
    %v64 = vpop.permute.xlu0 %63
    %65 = vrot.lane.b32.xlu0 %v56, 1
    %v66 = vpop.permute.xlu0 %65
    %v67 = vsel %vm62, %v64, %v66
    %v68 = vmul.f32 %v56, %v57
    %v69 = vmul.f32 %v67, %v58
    %v70 = vadd.f32 %v68, %v69
    %71 = vst [vmem:[#allocation8] sm:$0xf] %v70
    // Predicated region
    $region26: #{tpu_custom_call.1} parent=1 // pred_check
      _
    $region27: #{tpu_custom_call.1} parent=1 // pred_check_branch
      %73 = sbr.rel (0) target = $region29
    $region28: #{tpu_custom_call.1} parent=1 // pred_region
      %75 = vsyncadd [#allocation4], 0
      %s77 = sshll.u32 [#allocation8], 4
      %s78 = int_to_ptr.vmem [resolvable:$true] %s77
      %s79 = sshll.u32 %s3, 4
      %s80 = int_to_ptr.hbm [resolvable:$true] %s79
      %82 = dma.vmem_to_hbm [thread:$0]  %s78, 64, %s80, [#allocation4]
    $region29: #{tpu_custom_call.1} parent=1 // pred_fallthru
      _
    // Predicated region
    $region30: #{tpu_custom_call.1} parent=1 // pred_check
      _
    $region31: #{tpu_custom_call.1} parent=1 // pred_check_branch
      %84 = sbr.rel (0) target = $region33
    $region32: #{tpu_custom_call.1} parent=1 // pred_region
      %86 = dma.done [#allocation4], 64
    $region33: #{tpu_custom_call.1} parent=1 // pred_fallthru
      _
    %87 = vsyncpa [#allocation3], 1
    %88 = vsyncpa [#allocation6], 1
    %89 = vsyncpa [#allocation4], 1

</llo_original>
